<compile_context>
chip_gen: v6e
topology: v6e:2x2x1
jax: 0.10.0
libtpu: 0.0.40
codegen_flags: <defaults>
</compile_context>

<pallas_src>
import functools

import jax
import jax.numpy as jnp
import numpy as np
from jax.experimental import pallas as pl
from jax.experimental.pallas import tpu as pltpu


class Cfg:
    # EEGNet hyper-params for data_type='time_features', dataset_type='p14'
    D = 2
    F1 = 8
    F2 = 16          # D * F1
    kh = 3           # conv1 kernel (3, 1), padding='same'
    p1 = 2           # AvgPool2d (2, 1)
    p2 = 4           # AvgPool2d (4, 1)
    k2 = 2           # depth_conv2 kernel (2, 1)
    fc_size = 16
    eeg_channels = 14


def _elu(y):
    # exp only on the non-positive branch so the dead branch cannot overflow
    return jnp.where(y > 0, y, jnp.exp(jnp.minimum(y, 0.0)) - 1.0)


def eegnet_kernel(
    x_ref,       # VMEM (BN, Cin, H, W)   unpadded input block
    w1_ref,      # VMEM (Cin*kh*W, F2)    fused conv1∘bn1∘depth_conv1∘bn2 weights
    b1_ref,      # VMEM (1, F2)           fused bias
    dw2_ref,     # VMEM (k2, 1, 1, F2)    depth_conv2 taps
    pw_ref,      # VMEM (F2, F2)          point_conv weight^T with bn3 scale folded
    b3_ref,      # VMEM (1, F2)           bn3 shift
    wfc_ref,     # VMEM (fc_size, K)      fc1 weight, transposed
    bfc_ref,     # VMEM (1, K)            fc1 bias
    out_ref,     # VMEM (BN, K)
    xpad_scr,    # VMEM (BN, Cin, Hp, W)  'same'-padded input scratch
    slab_scr,    # VMEM (BN*H, Cin*kh*W)  im2col scratch
    *, BN, Cin, H, W, kh, ph_lo, ph_hi, F2, p1, k2, p2, K, compute_dtype,
):
    f32 = jnp.float32
    cd = compute_dtype

    # ---- 'same' padding along time, inside the kernel (no extra HBM round trip) ----
    if ph_lo > 0:
        xpad_scr[:, :, 0:ph_lo, :] = jnp.zeros((BN, Cin, ph_lo, W), f32)
    if ph_hi > 0:
        xpad_scr[:, :, ph_lo + H:ph_lo + H + ph_hi, :] = jnp.zeros((BN, Cin, ph_hi, W), f32)
    xpad_scr[:, :, ph_lo:ph_lo + H, :] = x_ref[...].astype(f32)

    # ---- im2col slab: column block (c, dh) holds the dh-shifted temporal view ----
    for c in range(Cin):
        for dh in range(kh):
            piece = xpad_scr[:, c, dh:dh + H, :]                   # (BN, H, W)
            off = (c * kh + dh) * W
            slab_scr[:, off:off + W] = piece.reshape(BN * H, W)

    # ---- fused conv1 + bn1 + depth_conv1 + bn2 as ONE MXU matmul, then ELU ----
    y2 = jnp.dot(slab_scr[...].astype(cd), w1_ref[...],
                 preferred_element_type=f32) + b1_ref[...]         # (BN*H, F2)
    y2 = _elu(y2)

    # ---- avg pool1 over time, batched (reshape + mean, no per-sample loop) ----
    H1 = H // p1
    y3 = jnp.mean(y2.reshape(BN, H, F2)[:, :H1 * p1, :].reshape(BN, H1, p1, F2), axis=2)
    # TODO(synk): dropout after pool1 treated as identity (inference semantics).

    # ---- separable conv: depthwise (k2,1) taps + pointwise 1x1 (bn3 folded), ELU ----
    H2 = H1 - k2 + 1
    dw2 = dw2_ref[...]                                             # (k2, 1, 1, F2)
    y4 = dw2[0] * y3[:, 0:H2, :]
    for dh in range(1, k2):
        y4 = y4 + dw2[dh] * y3[:, dh:dh + H2, :]
    y5 = jnp.dot(y4.reshape(BN * H2, F2).astype(cd), pw_ref[...],
                 preferred_element_type=f32) + b3_ref[...]         # (BN*H2, F2)
    y5 = _elu(y5)

    # ---- avg pool2 + flatten (Hf == 1) + fc1 + softmax, batched; one store ----
    feat = jnp.mean(y5.reshape(BN, H2, F2)[:, 0:p2, :], axis=1)    # (BN, F2)
    # TODO(synk): dropout after pool2 treated as identity (inference semantics).
    logits = jnp.dot(feat.astype(cd), wfc_ref[...],
                     preferred_element_type=f32) + bfc_ref[...]    # (BN, K)
    m = jnp.max(logits, axis=-1, keepdims=True)
    e = jnp.exp(logits - m)
    inv = pl.reciprocal(jnp.sum(e, axis=-1, keepdims=True), approx=True)
    out_ref[...] = (e * inv).astype(out_ref.dtype)


def bn_scale_shift(bn, eps=1e-5):
    gamma, beta, mean, var = bn
    scale = gamma / jnp.sqrt(var + eps)
    return scale, beta - mean * scale


def build_fused_params(params, cfg, Cin, K, compute_dtype):
    kh, D, F2, W, k2 = cfg.kh, cfg.D, cfg.F2, cfg.eeg_channels, cfg.k2
    s1, b1 = bn_scale_shift(params['bn1'])          # (F1,)
    s2, b2 = bn_scale_shift(params['bn2'])          # (F2,)
    s3, b3 = bn_scale_shift(params['bn3'])          # (F2,)
    w1, dw1, dw2, pw = params['w1'], params['dw1'], params['dw2'], params['pw']

    fidx = jnp.arange(F2) // D                      # F1 channel feeding each F2 output
    # Weff[(c,dh,w), f2] = s2[f2] * s1[f2//D] * w1[f2//D,c,dh] * dw1[f2,w]
    weff = ((s2 * s1[fidx])[:, None, None, None]
            * w1[fidx][:, :, :, None]
            * dw1[:, None, None, :])                # (F2, Cin, kh, W)
    weff = jnp.transpose(weff, (1, 2, 3, 0)).reshape(Cin * kh * W, F2)
    # bias: bn1 shift carried through the (1,W) grouped conv, then bn2 affine
    beff = s2 * b1[fidx] * jnp.sum(dw1, axis=1) + b2

    pw_eff = pw.T * s3[None, :]                     # point_conv^T with bn3 scale folded
    dw2b = dw2.T.reshape(k2, 1, 1, F2)              # dw2b[dh,0,0,f2] = dw2[f2,dh]
    wfcT = params['wfc'].T                          # (fc_size, K)
    bfc = params['bfc'].reshape(1, K)

    cd = compute_dtype
    return (weff.astype(cd), beff.reshape(1, F2).astype(jnp.float32),
            dw2b.astype(jnp.float32), pw_eff.astype(cd),
            b3.reshape(1, F2).astype(jnp.float32),
            wfcT.astype(cd), bfc.astype(jnp.float32))


def _default_compute_dtype():
    # bf16 MXU operands (f32 accumulate) on v6e/v7x; keep f32 on v5e / unknown chips.
    try:
        kind = jax.devices()[0].device_kind.lower()
    except Exception:
        return jnp.float32
    return jnp.bfloat16 if ('v6' in kind or 'v7' in kind) else jnp.float32


def _pick_batch_block(N, Cin, H, W, F2, kh, vmem_budget_bytes=8 << 20):
    """Largest batch block whose f32 working set stays under a conservative VMEM budget
    (conservative enough for v7x's 64 MiB / 32 MiB-scoped VMEM)."""
    hp = H + kh - 1
    per_sample = 4 * (Cin * hp * W            # padded-input scratch
                      + Cin * kh * W * H      # im2col slab scratch
                      + 2 * Cin * H * W       # double-buffered input block
                      + 4 * H * F2)           # channels-last activations
    bn = int(max(1, vmem_budget_bytes // max(per_sample, 1)))
    if bn >= N:
        return N
    return max(8, (bn // 8) * 8)              # tiled: out block's sublane dim must be 8-aligned


def eegnet_forward(x, params, cfg, K, compute_dtype=None):
    N, Cin, H, W = x.shape
    assert W == cfg.eeg_channels
    kh, F2 = cfg.kh, cfg.F2
    p1, k2, p2 = cfg.p1, cfg.k2, cfg.p2
    H1 = H // p1
    H2 = H1 - k2 + 1
    Hf = H2 // p2
    assert F2 * Hf == cfg.fc_size
    # TODO(synk): configs with Hf > 1 ('raw'/'preprocessed') would need an in-kernel
    #             (F2, Hf) flatten transpose before fc1; only the Hf == 1 path is built.
    assert Hf == 1

    if compute_dtype is None:
        compute_dtype = _default_compute_dtype()

    ph_lo = (kh - 1) // 2
    ph_hi = kh - 1 - ph_lo                          # PyTorch 'same' padding
    Hp = H + kh - 1

    weff, beff, dw2b, pw_eff, b3, wfcT, bfc = build_fused_params(
        params, cfg, Cin, K, compute_dtype)

    BN = _pick_batch_block(N, Cin, H, W, F2, kh)
    grid = (pl.cdiv(N, BN),)

    kernel = functools.partial(
        eegnet_kernel, BN=BN, Cin=Cin, H=H, W=W, kh=kh, ph_lo=ph_lo, ph_hi=ph_hi,
        F2=F2, p1=p1, k2=k2, p2=p2, K=K, compute_dtype=compute_dtype)

    rep2 = lambda i: (0, 0)
    return pl.pallas_call(
        kernel,
        out_shape=jax.ShapeDtypeStruct((N, K), jnp.float32),
        grid=grid,
        in_specs=[
            pl.BlockSpec((BN, Cin, H, W), lambda i: (i, 0, 0, 0)),   # input, tiled over batch
            pl.BlockSpec((Cin * kh * W, F2), rep2),
            pl.BlockSpec((1, F2), rep2),
            pl.BlockSpec((k2, 1, 1, F2), lambda i: (0, 0, 0, 0)),
            pl.BlockSpec((F2, F2), rep2),
            pl.BlockSpec((1, F2), rep2),
            pl.BlockSpec((cfg.fc_size, K), rep2),
            pl.BlockSpec((1, K), rep2),
        ],
        out_specs=pl.BlockSpec((BN, K), lambda i: (i, 0)),
        scratch_shapes=[
            pltpu.VMEM((BN, Cin, Hp, W), jnp.float32),
            pltpu.VMEM((BN * H, Cin * kh * W), jnp.float32),
        ],
        compiler_params=pltpu.CompilerParams(
            dimension_semantics=("parallel",)),
    )(x, weff, beff, dw2b, pw_eff, b3, wfcT, bfc)


def init_params(key, Cin, K, cfg):
    ks = jax.random.split(key, 9)
    s = 0.3
    w1 = s * jax.random.normal(ks[0], (cfg.F1, Cin, cfg.kh), jnp.float32)        # conv1
    dw1 = s * jax.random.normal(ks[1], (cfg.F2, cfg.eeg_channels), jnp.float32)  # depth_conv1
    dw2 = s * jax.random.normal(ks[2], (cfg.F2, cfg.k2), jnp.float32)            # depth_conv2
    pw = s * jax.random.normal(ks[3], (cfg.F2, cfg.F2), jnp.float32)             # point_conv
    wfc = s * jax.random.normal(ks[4], (K, cfg.fc_size), jnp.float32)            # fc1 weight
    bfc = s * jax.random.normal(ks[5], (K,), jnp.float32)                        # fc1 bias

    def bn(k, C):
        ka, kb, kc, kd = jax.random.split(k, 4)
        gamma = 1.0 + 0.1 * jax.random.normal(ka, (C,), jnp.float32)
        beta = 0.1 * jax.random.normal(kb, (C,), jnp.float32)
        mean = 0.1 * jax.random.normal(kc, (C,), jnp.float32)
        var = 0.9 + 0.2 * jax.random.uniform(kd, (C,), jnp.float32)
        return gamma, beta, mean, var

    return dict(w1=w1, dw1=dw1, dw2=dw2, pw=pw, wfc=wfc, bfc=bfc,
                bn1=bn(ks[6], cfg.F1), bn2=bn(ks[7], cfg.F2), bn3=bn(ks[8], cfg.F2))


def reference_forward(x, params, cfg, K):
    """Pure numpy re-implementation of the PyTorch forward (eval BN, no dropout)."""
    x = np.asarray(x, np.float64)
    w1 = np.asarray(params['w1'], np.float64)
    dw1 = np.asarray(params['dw1'], np.float64)
    dw2 = np.asarray(params['dw2'], np.float64)
    pw = np.asarray(params['pw'], np.float64)
    wfc = np.asarray(params['wfc'], np.float64)
    bfc = np.asarray(params['bfc'], np.float64)

    def bn_np(bn):
        g, b, m, v = [np.asarray(a, np.float64) for a in bn]
        s = g / np.sqrt(v + 1e-5)
        return s, b - m * s

    s1, b1 = bn_np(params['bn1'])
    s2, b2 = bn_np(params['bn2'])
    s3, b3 = bn_np(params['bn3'])

    N, Cin, H, W = x.shape
    kh, F1, D, F2, p1, k2, p2 = cfg.kh, cfg.F1, cfg.D, cfg.F2, cfg.p1, cfg.k2, cfg.p2
    ph_lo = (kh - 1) // 2
    xp = np.pad(x, ((0, 0), (0, 0), (ph_lo, kh - 1 - ph_lo), (0, 0)))

    y1 = np.zeros((N, F1, H, W))
    for f in range(F1):
        for c in range(Cin):
            for dh in range(kh):
                y1[:, f] += w1[f, c, dh] * xp[:, c, dh:dh + H, :]
    y1 = y1 * s1[None, :, None, None] + b1[None, :, None, None]

    y2 = np.zeros((N, F2, H))
    for f2 in range(F2):
        y2[:, f2] = np.einsum('nhw,w->nh', y1[:, f2 // D], dw1[f2])
    y2 = y2 * s2[None, :, None] + b2[None, :, None]
    y2 = np.where(y2 > 0, y2, np.exp(y2) - 1)

    H1 = H // p1
    y3 = y2[:, :, :H1 * p1].reshape(N, F2, H1, p1).mean(axis=3)

    H2 = H1 - k2 + 1
    y4 = np.zeros((N, F2, H2))
    for dh in range(k2):
        y4 += dw2[None, :, dh, None] * y3[:, :, dh:dh + H2]
    y5 = np.einsum('gf,nfh->ngh', pw, y4)
    y5 = y5 * s3[None, :, None] + b3[None, :, None]
    y5 = np.where(y5 > 0, y5, np.exp(y5) - 1)

    Hf = H2 // p2
    y6 = y5[:, :, :Hf * p2].reshape(N, F2, Hf, p2).mean(axis=3)
    feat = y6.reshape(N, F2 * Hf)
    logits = feat @ wfc.T + bfc
    e = np.exp(logits - logits.max(axis=1, keepdims=True))
    return e / e.sum(axis=1, keepdims=True)


if __name__ == "__main__":
    cfg = Cfg()
    N, Cin, H, K = 2, 1, 16, 4
    W = cfg.eeg_channels                                # depth_conv1 requires W == 14

    key = jax.random.PRNGKey(0)
    kx, kp = jax.random.split(key)
    x = jax.random.normal(kx, (N, Cin, H, W), jnp.float32)
    params = init_params(kp, Cin, K, cfg)

    cd = _default_compute_dtype()
    out = eegnet_forward(x, params, cfg, K, compute_dtype=cd)
    out = jax.block_until_ready(out)

    ref = reference_forward(x, params, cfg, K)
    assert out.shape == (N, K)
    tol = 2e-2 if cd == jnp.float32 else 4e-2           # wider tolerance for bf16 MXU operands
    np.testing.assert_allclose(np.asarray(out, np.float64), ref, rtol=tol, atol=tol)
    print("KERNEL_OK")
</pallas_src>

<mosaic_0001>
module attributes {stable_mosaic.version = 11 : i64} {
  func.func @eegnet_kernel(%arg0: i32, %arg1: memref<2x1x16x14xf32, #tpu.memory_space<vmem>>, %arg2: memref<42x16xf32, #tpu.memory_space<vmem>>, %arg3: memref<1x16xf32, #tpu.memory_space<vmem>>, %arg4: memref<2x1x1x16xf32, #tpu.memory_space<vmem>>, %arg5: memref<16x16xf32, #tpu.memory_space<vmem>>, %arg6: memref<1x16xf32, #tpu.memory_space<vmem>>, %arg7: memref<16x4xf32, #tpu.memory_space<vmem>>, %arg8: memref<1x4xf32, #tpu.memory_space<vmem>>, %arg9: memref<2x4xf32, #tpu.memory_space<vmem>>, %arg10: memref<2x1x18x14xf32, #tpu.memory_space<vmem>>, %arg11: memref<32x42xf32, #tpu.memory_space<vmem>>) attributes {dimension_semantics = [#tpu.dimension_semantics<parallel>], iteration_bounds = array<i64: 1>, scalar_prefetch = 0 : i64, scratch_operands = 2 : i64, tpu.core_type = #tpu.core_type<tc>, window_params = [{transform_indices = @transform_0, window_bounds = array<i64: 2, 1, 16, 14>}, {pipeline_mode = #tpu.pipeline_mode<synchronous>, transform_indices = @transform_1, window_bounds = array<i64: 42, 16>}, {pipeline_mode = #tpu.pipeline_mode<synchronous>, transform_indices = @transform_2, window_bounds = array<i64: 1, 16>}, {pipeline_mode = #tpu.pipeline_mode<synchronous>, transform_indices = @transform_3, window_bounds = array<i64: 2, 1, 1, 16>}, {pipeline_mode = #tpu.pipeline_mode<synchronous>, transform_indices = @transform_4, window_bounds = array<i64: 16, 16>}, {pipeline_mode = #tpu.pipeline_mode<synchronous>, transform_indices = @transform_5, window_bounds = array<i64: 1, 16>}, {pipeline_mode = #tpu.pipeline_mode<synchronous>, transform_indices = @transform_6, window_bounds = array<i64: 16, 4>}, {pipeline_mode = #tpu.pipeline_mode<synchronous>, transform_indices = @transform_7, window_bounds = array<i64: 1, 4>}, {transform_indices = @transform_8, window_bounds = array<i64: 2, 4>}]} {
    %cst = arith.constant 0.000000e+00 : f32
    %0 = vector.broadcast %cst : f32 to vector<2x1x1x14xf32>
    %c0 = arith.constant 0 : index
    %c0_0 = arith.constant 0 : index
    %c0_1 = arith.constant 0 : index
    %c0_2 = arith.constant 0 : index
    %1 = vector.load %arg10[%c0, %c0_0, %c0_1, %c0_2] : memref<2x1x18x14xf32, #tpu.memory_space<vmem>>, vector<2x1x1x14xf32>
    tpu.vector_store %arg10[%c0, %c0_0, %c0_1, %c0_2], %0 {strides = array<i32>} : memref<2x1x18x14xf32, #tpu.memory_space<vmem>>, vector<2x1x1x14xf32>,
    %cst_3 = arith.constant 0.000000e+00 : f32
    %2 = vector.broadcast %cst_3 : f32 to vector<2x1x1x14xf32>
    %c0_4 = arith.constant 0 : index
    %c0_5 = arith.constant 0 : index
    %c17 = arith.constant 17 : index
    %c0_6 = arith.constant 0 : index
    %3 = vector.load %arg10[%c0_4, %c0_5, %c17, %c0_6] : memref<2x1x18x14xf32, #tpu.memory_space<vmem>>, vector<2x1x1x14xf32>
    tpu.vector_store %arg10[%c0_4, %c0_5, %c17, %c0_6], %2 {strides = array<i32>} : memref<2x1x18x14xf32, #tpu.memory_space<vmem>>, vector<2x1x1x14xf32>,
    %c0_7 = arith.constant 0 : index
    %c0_8 = arith.constant 0 : index
    %c0_9 = arith.constant 0 : index
    %c0_10 = arith.constant 0 : index
    %4 = vector.load %arg1[%c0_7, %c0_8, %c0_9, %c0_10] : memref<2x1x16x14xf32, #tpu.memory_space<vmem>>, vector<2x1x16x14xf32>
    %c0_11 = arith.constant 0 : index
    %c0_12 = arith.constant 0 : index
    %c1 = arith.constant 1 : index
    %c0_13 = arith.constant 0 : index
    %5 = vector.load %arg10[%c0_11, %c0_12, %c1, %c0_13] : memref<2x1x18x14xf32, #tpu.memory_space<vmem>>, vector<2x1x16x14xf32>
    tpu.vector_store %arg10[%c0_11, %c0_12, %c1, %c0_13], %4 {strides = array<i32>} : memref<2x1x18x14xf32, #tpu.memory_space<vmem>>, vector<2x1x16x14xf32>,
    %c0_14 = arith.constant 0 : index
    %c0_15 = arith.constant 0 : index
    %c0_16 = arith.constant 0 : index
    %c0_17 = arith.constant 0 : index
    %6 = vector.load %arg10[%c0_14, %c0_15, %c0_16, %c0_17] : memref<2x1x18x14xf32, #tpu.memory_space<vmem>>, vector<2x1x16x14xf32>
    %7 = vector.shape_cast %6 : vector<2x1x16x14xf32> to vector<2x16x14xf32>
    %8 = vector.shape_cast %7 : vector<2x16x14xf32> to vector<32x14xf32>
    %c0_18 = arith.constant 0 : index
    %c0_19 = arith.constant 0 : index
    %9 = vector.load %arg11[%c0_18, %c0_19] : memref<32x42xf32, #tpu.memory_space<vmem>>, vector<32x14xf32>
    tpu.vector_store %arg11[%c0_18, %c0_19], %8 {strides = array<i32>} : memref<32x42xf32, #tpu.memory_space<vmem>>, vector<32x14xf32>,
    %c0_20 = arith.constant 0 : index
    %c0_21 = arith.constant 0 : index
    %c1_22 = arith.constant 1 : index
    %c0_23 = arith.constant 0 : index
    %10 = vector.load %arg10[%c0_20, %c0_21, %c1_22, %c0_23] : memref<2x1x18x14xf32, #tpu.memory_space<vmem>>, vector<2x1x16x14xf32>
    %11 = vector.shape_cast %10 : vector<2x1x16x14xf32> to vector<2x16x14xf32>
    %12 = vector.shape_cast %11 : vector<2x16x14xf32> to vector<32x14xf32>
    %c0_24 = arith.constant 0 : index
    %c14 = arith.constant 14 : index
    %13 = vector.load %arg11[%c0_24, %c14] : memref<32x42xf32, #tpu.memory_space<vmem>>, vector<32x14xf32>
    tpu.vector_store %arg11[%c0_24, %c14], %12 {strides = array<i32>} : memref<32x42xf32, #tpu.memory_space<vmem>>, vector<32x14xf32>,
    %c0_25 = arith.constant 0 : index
    %c0_26 = arith.constant 0 : index
    %c2 = arith.constant 2 : index
    %c0_27 = arith.constant 0 : index
    %14 = vector.load %arg10[%c0_25, %c0_26, %c2, %c0_27] : memref<2x1x18x14xf32, #tpu.memory_space<vmem>>, vector<2x1x16x14xf32>
    %15 = vector.shape_cast %14 : vector<2x1x16x14xf32> to vector<2x16x14xf32>
    %16 = vector.shape_cast %15 : vector<2x16x14xf32> to vector<32x14xf32>
    %c0_28 = arith.constant 0 : index
    %c28 = arith.constant 28 : index
    %17 = vector.load %arg11[%c0_28, %c28] : memref<32x42xf32, #tpu.memory_space<vmem>>, vector<32x14xf32>
    tpu.vector_store %arg11[%c0_28, %c28], %16 {strides = array<i32>} : memref<32x42xf32, #tpu.memory_space<vmem>>, vector<32x14xf32>,
    %c0_29 = arith.constant 0 : index
    %c0_30 = arith.constant 0 : index
    %18 = vector.load %arg11[%c0_29, %c0_30] : memref<32x42xf32, #tpu.memory_space<vmem>>, vector<32x42xf32>
    %c0_31 = arith.constant 0 : index
    %c0_32 = arith.constant 0 : index
    %19 = vector.load %arg2[%c0_31, %c0_32] : memref<42x16xf32, #tpu.memory_space<vmem>>, vector<42x16xf32>
    %cst_33 = arith.constant dense<0.000000e+00> : vector<32x16xf32>
    %20 = tpu.matmul %18, %19, %cst_33 {dimension_numbers = #tpu.dot_dimension_numbers<[1], [0], [0], [1], [0, 0, 1, 1], [], []>} : vector<32x42xf32>, vector<42x16xf32>, vector<32x16xf32> -> vector<32x16xf32>
    %c0_34 = arith.constant 0 : index
    %c0_35 = arith.constant 0 : index
    %21 = vector.load %arg3[%c0_34, %c0_35] : memref<1x16xf32, #tpu.memory_space<vmem>>, vector<1x16xf32>
    %22 = vector.broadcast %21 : vector<1x16xf32> to vector<32x16xf32>
    %23 = arith.addf %20, %22 : vector<32x16xf32>
    %cst_36 = arith.constant 0.000000e+00 : f32
    %24 = vector.broadcast %cst_36 : f32 to vector<32x16xf32>
    %25 = arith.cmpf ogt, %23, %24 : vector<32x16xf32>
    %cst_37 = arith.constant 0.000000e+00 : f32
    %26 = vector.broadcast %cst_37 : f32 to vector<32x16xf32>
    %27 = arith.minimumf %23, %26 : vector<32x16xf32>
    %28 = math.exp %27 : vector<32x16xf32>
    %cst_38 = arith.constant 1.000000e+00 : f32
    %29 = vector.broadcast %cst_38 : f32 to vector<32x16xf32>
    %30 = arith.subf %28, %29 : vector<32x16xf32>
    %31 = arith.select %25, %23, %30 : vector<32x16xi1>, vector<32x16xf32>
    %32 = vector.shape_cast %31 : vector<32x16xf32> to vector<2x16x16xf32>
    %33 = vector.shape_cast %32 : vector<2x16x16xf32> to vector<2x8x2x16xf32>
    %cst_39 = arith.constant dense<0.000000e+00> : vector<2x8x16xf32>
    %34 = vector.multi_reduction <add>, %33, %cst_39 [2] : vector<2x8x2x16xf32> to vector<2x8x16xf32>
    %cst_40 = arith.constant 2.000000e+00 : f32
    %35 = vector.broadcast %cst_40 : f32 to vector<2x8x16xf32>
    %36 = arith.divf %34, %35 : vector<2x8x16xf32>
    %c0_41 = arith.constant 0 : index
    %c0_42 = arith.constant 0 : index
    %c0_43 = arith.constant 0 : index
    %c0_44 = arith.constant 0 : index
    %37 = vector.load %arg4[%c0_41, %c0_42, %c0_43, %c0_44] : memref<2x1x1x16xf32, #tpu.memory_space<vmem>>, vector<2x1x1x16xf32>
    %38 = vector.extract_strided_slice %37 {offsets = [0, 0, 0, 0], sizes = [1, 1, 1, 16], strides = [1, 1, 1, 1]} : vector<2x1x1x16xf32> to vector<1x1x1x16xf32>
    %39 = vector.shape_cast %38 : vector<1x1x1x16xf32> to vector<1x1x16xf32>
    %40 = vector.extract_strided_slice %36 {offsets = [0, 0, 0], sizes = [2, 7, 16], strides = [1, 1, 1]} : vector<2x8x16xf32> to vector<2x7x16xf32>
    %41 = vector.broadcast %39 : vector<1x1x16xf32> to vector<2x7x16xf32>
    %42 = arith.mulf %41, %40 : vector<2x7x16xf32>
    %43 = vector.extract_strided_slice %37 {offsets = [1, 0, 0, 0], sizes = [1, 1, 1, 16], strides = [1, 1, 1, 1]} : vector<2x1x1x16xf32> to vector<1x1x1x16xf32>
    %44 = vector.shape_cast %43 : vector<1x1x1x16xf32> to vector<1x1x16xf32>
    %45 = vector.extract_strided_slice %36 {offsets = [0, 1, 0], sizes = [2, 7, 16], strides = [1, 1, 1]} : vector<2x8x16xf32> to vector<2x7x16xf32>
    %46 = vector.broadcast %44 : vector<1x1x16xf32> to vector<2x7x16xf32>
    %47 = arith.mulf %46, %45 : vector<2x7x16xf32>
    %48 = arith.addf %42, %47 : vector<2x7x16xf32>
    %49 = vector.shape_cast %48 : vector<2x7x16xf32> to vector<14x16xf32>
    %c0_45 = arith.constant 0 : index
    %c0_46 = arith.constant 0 : index
    %50 = vector.load %arg5[%c0_45, %c0_46] : memref<16x16xf32, #tpu.memory_space<vmem>>, vector<16x16xf32>
    %cst_47 = arith.constant dense<0.000000e+00> : vector<14x16xf32>
    %51 = tpu.matmul %49, %50, %cst_47 {dimension_numbers = #tpu.dot_dimension_numbers<[1], [0], [0], [1], [0, 0, 1, 1], [], []>} : vector<14x16xf32>, vector<16x16xf32>, vector<14x16xf32> -> vector<14x16xf32>
    %c0_48 = arith.constant 0 : index
    %c0_49 = arith.constant 0 : index
    %52 = vector.load %arg6[%c0_48, %c0_49] : memref<1x16xf32, #tpu.memory_space<vmem>>, vector<1x16xf32>
    %53 = vector.broadcast %52 : vector<1x16xf32> to vector<14x16xf32>
    %54 = arith.addf %51, %53 : vector<14x16xf32>
    %cst_50 = arith.constant 0.000000e+00 : f32
    %55 = vector.broadcast %cst_50 : f32 to vector<14x16xf32>
    %56 = arith.cmpf ogt, %54, %55 : vector<14x16xf32>
    %cst_51 = arith.constant 0.000000e+00 : f32
    %57 = vector.broadcast %cst_51 : f32 to vector<14x16xf32>
    %58 = arith.minimumf %54, %57 : vector<14x16xf32>
    %59 = math.exp %58 : vector<14x16xf32>
    %cst_52 = arith.constant 1.000000e+00 : f32
    %60 = vector.broadcast %cst_52 : f32 to vector<14x16xf32>
    %61 = arith.subf %59, %60 : vector<14x16xf32>
    %62 = arith.select %56, %54, %61 : vector<14x16xi1>, vector<14x16xf32>
    %63 = vector.shape_cast %62 : vector<14x16xf32> to vector<2x7x16xf32>
    %64 = vector.extract_strided_slice %63 {offsets = [0, 0, 0], sizes = [2, 4, 16], strides = [1, 1, 1]} : vector<2x7x16xf32> to vector<2x4x16xf32>
    %cst_53 = arith.constant dense<0.000000e+00> : vector<2x16xf32>
    %65 = vector.multi_reduction <add>, %64, %cst_53 [1] : vector<2x4x16xf32> to vector<2x16xf32>
    %cst_54 = arith.constant 4.000000e+00 : f32
    %66 = vector.broadcast %cst_54 : f32 to vector<2x16xf32>
    %67 = arith.divf %65, %66 : vector<2x16xf32>
    %c0_55 = arith.constant 0 : index
    %c0_56 = arith.constant 0 : index
    %68 = vector.load %arg7[%c0_55, %c0_56] : memref<16x4xf32, #tpu.memory_space<vmem>>, vector<16x4xf32>
    %cst_57 = arith.constant dense<0.000000e+00> : vector<2x4xf32>
    %69 = tpu.matmul %67, %68, %cst_57 {dimension_numbers = #tpu.dot_dimension_numbers<[1], [0], [0], [1], [0, 0, 1, 1], [], []>} : vector<2x16xf32>, vector<16x4xf32>, vector<2x4xf32> -> vector<2x4xf32>
    %c0_58 = arith.constant 0 : index
    %c0_59 = arith.constant 0 : index
    %70 = vector.load %arg8[%c0_58, %c0_59] : memref<1x4xf32, #tpu.memory_space<vmem>>, vector<1x4xf32>
    %71 = vector.broadcast %70 : vector<1x4xf32> to vector<2x4xf32>
    %72 = arith.addf %69, %71 : vector<2x4xf32>
    %cst_60 = arith.constant dense<0xFF800000> : vector<2xf32>
    %73 = vector.multi_reduction <maximumf>, %72, %cst_60 [1] : vector<2x4xf32> to vector<2xf32>
    %74 = vector.shape_cast %73 : vector<2xf32> to vector<2x1xf32>
    %75 = vector.broadcast %74 : vector<2x1xf32> to vector<2x4xf32>
    %76 = arith.subf %72, %75 : vector<2x4xf32>
    %77 = math.exp %76 : vector<2x4xf32>
    %cst_61 = arith.constant dense<0.000000e+00> : vector<2xf32>
    %78 = vector.multi_reduction <add>, %77, %cst_61 [1] : vector<2x4xf32> to vector<2xf32>
    %79 = vector.shape_cast %78 : vector<2xf32> to vector<2x1xf32>
    %80 = tpu.reciprocal %79 {approx = true} : vector<2x1xf32> -> vector<2x1xf32>
    %81 = vector.broadcast %80 : vector<2x1xf32> to vector<2x4xf32>
    %82 = arith.mulf %77, %81 : vector<2x4xf32>
    %c0_62 = arith.constant 0 : index
    %c0_63 = arith.constant 0 : index
    %83 = vector.load %arg9[%c0_62, %c0_63] : memref<2x4xf32, #tpu.memory_space<vmem>>, vector<2x4xf32>
    tpu.vector_store %arg9[%c0_62, %c0_63], %82 {strides = array<i32>} : memref<2x4xf32, #tpu.memory_space<vmem>>, vector<2x4xf32>,
    return
  }
  func.func @transform_0(%arg0: i32) -> (i32, i32, i32, i32) {
    %c0_i32 = arith.constant 0 : i32
    %c0_i32_0 = arith.constant 0 : i32
    %c0_i32_1 = arith.constant 0 : i32
    %c0_i32_2 = arith.constant 0 : i32
    return %arg0, %c0_i32, %c0_i32_0, %c0_i32_1 : i32, i32, i32, i32
  }
  func.func @transform_1(%arg0: i32) -> (i32, i32) {
    %c0_i32 = arith.constant 0 : i32
    %c0_i32_0 = arith.constant 0 : i32
    %c0_i32_1 = arith.constant 0 : i32
    return %c0_i32, %c0_i32_0 : i32, i32
  }
  func.func @transform_2(%arg0: i32) -> (i32, i32) {
    %c0_i32 = arith.constant 0 : i32
    %c0_i32_0 = arith.constant 0 : i32
    %c0_i32_1 = arith.constant 0 : i32
    return %c0_i32, %c0_i32_0 : i32, i32
  }
  func.func @transform_3(%arg0: i32) -> (i32, i32, i32, i32) {
    %c0_i32 = arith.constant 0 : i32
    %c0_i32_0 = arith.constant 0 : i32
    %c0_i32_1 = arith.constant 0 : i32
    %c0_i32_2 = arith.constant 0 : i32
    %c0_i32_3 = arith.constant 0 : i32
    return %c0_i32, %c0_i32_0, %c0_i32_1, %c0_i32_2 : i32, i32, i32, i32
  }
  func.func @transform_4(%arg0: i32) -> (i32, i32) {
    %c0_i32 = arith.constant 0 : i32
    %c0_i32_0 = arith.constant 0 : i32
    %c0_i32_1 = arith.constant 0 : i32
    return %c0_i32, %c0_i32_0 : i32, i32
  }
  func.func @transform_5(%arg0: i32) -> (i32, i32) {
    %c0_i32 = arith.constant 0 : i32
    %c0_i32_0 = arith.constant 0 : i32
    %c0_i32_1 = arith.constant 0 : i32
    return %c0_i32, %c0_i32_0 : i32, i32
  }
  func.func @transform_6(%arg0: i32) -> (i32, i32) {
    %c0_i32 = arith.constant 0 : i32
    %c0_i32_0 = arith.constant 0 : i32
    %c0_i32_1 = arith.constant 0 : i32
    return %c0_i32, %c0_i32_0 : i32, i32
  }
  func.func @transform_7(%arg0: i32) -> (i32, i32) {
    %c0_i32 = arith.constant 0 : i32
    %c0_i32_0 = arith.constant 0 : i32
    %c0_i32_1 = arith.constant 0 : i32
    return %c0_i32, %c0_i32_0 : i32, i32
  }
  func.func @transform_8(%arg0: i32) -> (i32, i32) {
    %c0_i32 = arith.constant 0 : i32
    %c0_i32_0 = arith.constant 0 : i32
    return %arg0, %c0_i32 : i32, i32
  }
}

</mosaic_0001>

<llo_original>
// kernel: tpu_custom_call.1
$region0: #{tpu_custom_call.1}
  #allocation0 [shape = 'u32[]', space=smem, size = 0x4, offset = 0x4, fixed_abs, tag = 'smem constant byte address 0x4 - core index']
  #allocation1 [shape = 'u32[144,128]{1,0:T(1,128)}', space=vmem, size = 0x12000, scoped, tag = 'internal scratch']
  #allocation2 [shape = 'f32[2,1,18,14]{3,2,1,0:T(8,128)}', space=vmem, size = 0x6000, scoped, tag = 'scratch operand']
  #allocation3 [shape = 'f32[32,42]{1,0:T(8,128)}', space=vmem, size = 0x4000, scoped, tag = 'scratch operand']
  %s0 = inlined_call_operand.vmem [shape: f32[2,1,16,14], index: 0, kind: input, shape index: {}]
  %s1 = inlined_call_operand.vmem [shape: f32[42,16], index: 1, kind: input, shape index: {}]
  %s2 = inlined_call_operand.vmem [shape: f32[1,16], index: 2, kind: input, shape index: {}]
  %s3 = inlined_call_operand.vmem [shape: f32[2,1,1,16], index: 3, kind: input, shape index: {}]
  %s4 = inlined_call_operand.vmem [shape: f32[16,16], index: 4, kind: input, shape index: {}]
  %s5 = inlined_call_operand.vmem [shape: f32[1,16], index: 5, kind: input, shape index: {}]
  %s6 = inlined_call_operand.vmem [shape: f32[16,4], index: 6, kind: input, shape index: {}]
  %s7 = inlined_call_operand.vmem [shape: f32[1,4], index: 7, kind: input, shape index: {}]
  %s8 = inlined_call_operand.hbm [shape: f32[2,4], index: 8, kind: output, shape index: {}]
  %s9 = sld [smem:[#allocation0]]
  $region42: #{tpu_custom_call.1} parent=0
    _
  %s11 = ssub.s32 1, %s9
  %s12 = scalar_select 0, %s11, %s9
  $region1: #{tpu_custom_call.1} parent=0
    #allocation4 [shape = 'u8[1024]{0}', space=vmem, size = 0x400, scoped, tag = 'output window, operand 0, single buffered']
    #allocation5 [shape = 's32[1]{0}', space=sflag, size = 0x4, scoped, tag = 'scoped memory for tpu_custom_call.1']
    %13 = vsyncpa [#allocation5], 0
    // Predicated region
    $region2: #{tpu_custom_call.1} parent=1 // pred_check
      _
    $region3: #{tpu_custom_call.1} parent=1 // pred_check_branch
      %15 = sbr.rel (0) target = $region5
    $region4: #{tpu_custom_call.1} parent=1 // pred_region
      _
    $region5: #{tpu_custom_call.1} parent=1 // pred_fallthru
      _
    // Predicated region
    $region6: #{tpu_custom_call.1} parent=1 // pred_check
      _
    $region7: #{tpu_custom_call.1} parent=1 // pred_check_branch
      %17 = sbr.rel (0) target = $region9
    $region8: #{tpu_custom_call.1} parent=1 // pred_region
      _
    $region9: #{tpu_custom_call.1} parent=1 // pred_fallthru
      _
    // Predicated region
    $region10: #{tpu_custom_call.1} parent=1 // pred_check
      _
    $region11: #{tpu_custom_call.1} parent=1 // pred_check_branch
      %19 = sbr.rel (0) target = $region13
    $region12: #{tpu_custom_call.1} parent=1 // pred_region
      _
    $region13: #{tpu_custom_call.1} parent=1 // pred_fallthru
      _
    // Predicated region
    $region14: #{tpu_custom_call.1} parent=1 // pred_check
      _
    $region15: #{tpu_custom_call.1} parent=1 // pred_check_branch
      %21 = sbr.rel (0) target = $region17
    $region16: #{tpu_custom_call.1} parent=1 // pred_region
      _
    $region17: #{tpu_custom_call.1} parent=1 // pred_fallthru
      _
    // Predicated region
    $region18: #{tpu_custom_call.1} parent=1 // pred_check
      _
    $region19: #{tpu_custom_call.1} parent=1 // pred_check_branch
      %23 = sbr.rel (0) target = $region21
    $region20: #{tpu_custom_call.1} parent=1 // pred_region
      _
    $region21: #{tpu_custom_call.1} parent=1 // pred_fallthru
      _
    // Predicated region
    $region22: #{tpu_custom_call.1} parent=1 // pred_check
      _
    $region23: #{tpu_custom_call.1} parent=1 // pred_check_branch
      %25 = sbr.rel (0) target = $region25
    $region24: #{tpu_custom_call.1} parent=1 // pred_region
      _
    $region25: #{tpu_custom_call.1} parent=1 // pred_fallthru
      _
    // Predicated region
    $region26: #{tpu_custom_call.1} parent=1 // pred_check
      _
    $region27: #{tpu_custom_call.1} parent=1 // pred_check_branch
      %27 = sbr.rel (0) target = $region29
    $region28: #{tpu_custom_call.1} parent=1 // pred_region
      _
    $region29: #{tpu_custom_call.1} parent=1 // pred_fallthru
      _
    // Predicated region
    $region30: #{tpu_custom_call.1} parent=1 // pred_check
      _
    $region31: #{tpu_custom_call.1} parent=1 // pred_check_branch
      %29 = sbr.rel (0) target = $region33
    $region32: #{tpu_custom_call.1} parent=1 // pred_region
      _
    $region33: #{tpu_custom_call.1} parent=1 // pred_fallthru
      _
    %vm30 = vcmask 106496
    %31 = vst.msk [vmem:[#allocation2] sm:$0x1] %vm30, 0.0
    %32 = vst.msk [vmem:[#allocation2 + $0x18] sm:$0x1] %vm30, 0.0
    %33 = vst.msk [vmem:[#allocation2 + $0x11] sm:$0x1] %vm30, 0.0
    %34 = vst.msk [vmem:[#allocation2 + $0x29] sm:$0x1] %vm30, 0.0
    %v35 = vld [vmem:[%s0] sm:$0xff]
    %v36 = vld [vmem:[%s0 + $0x8] sm:$0xff]
    %v37 = vld [vmem:[%s0 + $0x10] sm:$0xff]
    %v38 = vld [vmem:[%s0 + $0x18] sm:$0xff]
    %vm39 = vcmask 113664
    %40 = vst.msk [vmem:[#allocation2 + $0x1] sm:$0xff] %vm39, %v35
    %41 = vst.msk [vmem:[#allocation2 + $0x9] sm:$0xff] %vm39, %v36
    %42 = vst.msk [vmem:[#allocation2 + $0x19] sm:$0xff] %vm39, %v37
    %43 = vst.msk [vmem:[#allocation2 + $0x21] sm:$0xff] %vm39, %v38
    %v44 = vld [vmem:[#allocation2] sm:$0xff]
    %v45 = vld [vmem:[#allocation2 + $0x8] sm:$0xff]
    %v46 = vld [vmem:[#allocation2 + $0x18] sm:$0xff]
    %v47 = vld [vmem:[#allocation2 + $0x20] sm:$0xff]
    %48 = vst.msk [vmem:[#allocation3] sm:$0xff] %vm39, %v44
    %49 = vst.msk [vmem:[#allocation3 + $0x8] sm:$0xff] %vm39, %v45
    %50 = vst.msk [vmem:[#allocation3 + $0x10] sm:$0xff] %vm39, %v46
    %51 = vst.msk [vmem:[#allocation3 + $0x18] sm:$0xff] %vm39, %v47
    %v52 = vld [vmem:[#allocation2 + $0x1] sm:$0xff]
    %v53 = vld [vmem:[#allocation2 + $0x9] sm:$0xff]
    %v54 = vld [vmem:[#allocation2 + $0x19] sm:$0xff]
    %v55 = vld [vmem:[#allocation2 + $0x21] sm:$0xff]
    %60 = vrot.lane.b32.xlu0 %v52, 14
    %v61 = vpop.permute.xlu0 %60
    %62 = vrot.lane.b32.xlu0 %v53, 14
    %v63 = vpop.permute.xlu0 %62
    %64 = vrot.lane.b32.xlu0 %v54, 14
    %v65 = vpop.permute.xlu0 %64
    %66 = vrot.lane.b32.xlu0 %v55, 14
    %v67 = vpop.permute.xlu0 %66
    %vm72 = vcmask 228464
    %73 = vst.msk [vmem:[#allocation3] sm:$0xff] %vm72, %v61
    %74 = vst.msk [vmem:[#allocation3 + $0x8] sm:$0xff] %vm72, %v63
    %75 = vst.msk [vmem:[#allocation3 + $0x10] sm:$0xff] %vm72, %v65
    %76 = vst.msk [vmem:[#allocation3 + $0x18] sm:$0xff] %vm72, %v67
    %v77 = vld [vmem:[#allocation2 + $0x2] sm:$0xff]
    %v78 = vld [vmem:[#allocation2 + $0xa] sm:$0xff]
    %v79 = vld [vmem:[#allocation2 + $0x1a] sm:$0xff]
    %v80 = vld [vmem:[#allocation2 + $0x22] sm:$0xff]
    %85 = vrot.lane.b32.xlu0 %v77, 28
    %v86 = vpop.permute.xlu0 %85
    %87 = vrot.lane.b32.xlu0 %v78, 28
    %v88 = vpop.permute.xlu0 %87
    %89 = vrot.lane.b32.xlu0 %v79, 28
    %v90 = vpop.permute.xlu0 %89
    %91 = vrot.lane.b32.xlu0 %v80, 28
    %v92 = vpop.permute.xlu0 %91
    %vm97 = vcmask 343264
    %98 = vst.msk [vmem:[#allocation3] sm:$0xff] %vm97, %v86
    %99 = vst.msk [vmem:[#allocation3 + $0x8] sm:$0xff] %vm97, %v88
    %100 = vst.msk [vmem:[#allocation3 + $0x10] sm:$0xff] %vm97, %v90
    %101 = vst.msk [vmem:[#allocation3 + $0x18] sm:$0xff] %vm97, %v92
    %v102 = vld [vmem:[#allocation3] sm:$0xff]
    %v103 = vld [vmem:[#allocation3 + $0x8] sm:$0xff]
    %v104 = vld [vmem:[#allocation3 + $0x10] sm:$0xff]
    %v105 = vld [vmem:[#allocation3 + $0x18] sm:$0xff]
    %v106 = vld [vmem:[%s1] sm:$0xff]
    %v107 = vld [vmem:[%s1 + $0x8] sm:$0xff]
    %v108 = vld [vmem:[%s1 + $0x10] sm:$0xff]
    %v109 = vld [vmem:[%s1 + $0x18] sm:$0xff]
    %v110 = vld [vmem:[%s1 + $0x20] sm:$0xff]
    %v111 = vld [vmem:[%s1 + $0x28] sm:$0x3]
    %v112 = vld [vmem:[%s2] sm:$0x1]
    %v114 = vlaneseq
    %v115 = vshrl.u32 %v114, 7
    %v116 = vsub.s32 0, %v115
    %v117 = vrot.slane %v112, %v116
    %vm119 = vcmask 343040
    %v121 = vsel %vm119, %v102, 0
    %v124 = vsel %vm119, %v103, 0
    %v127 = vsel %vm119, %v104, 0
    %v130 = vsel %vm119, %v105, 0
    %vm132 = vcmask 1041408
    %v134 = vsel %vm132, %v111, 0
    %136 = vmatprep.subr.mxu0 0.0
    %137 = vmatpush1.msra.mxu0 0.0
    %138 = vmatprep.subr.mxu0 0.0
    %139 = vmatpush1.msra.mxu0 0.0
    %140 = vmatprep.subr.mxu0 0.0
    %141 = vmatpush1.msra.mxu0 0.0
    %142 = vmatprep.subr.mxu0 0.0
    %143 = vmatpush1.msra.mxu0 0.0
    %144 = vmatprep.subr.mxu0 0.0
    %145 = vmatpush1.msra.mxu0 0.0
    %146 = vmatprep.subr.mxu0 0.0
    %147 = vmatpush1.msra.mxu0 0.0
    %148 = vmatprep.subr.mxu0 0.0
    %149 = vmatpush1.msra.mxu0 0.0
    %150 = vmatprep.subr.mxu0 0.0
    %151 = vmatpush1.msra.mxu0 0.0
    %152 = vmatprep.subr.mxu0 0.0
    %153 = vmatpush1.msra.mxu0 0.0
    %154 = vmatprep.subr.mxu0 0.0
    %155 = vmatpush1.msra.mxu0 0.0
    %156 = vmatprep.subr.mxu0 0.0
    %157 = vmatpush1.msra.mxu0 %v134
    %158 = vmatprep.subr.mxu0 0.0
    %159 = vmatpush1.msra.mxu0 %v110
    %160 = vmatprep.subr.mxu0 0.0
    %161 = vmatpush1.msra.mxu0 %v109
    %162 = vmatprep.subr.mxu0 0.0
    %163 = vmatpush1.msra.mxu0 %v108
    %164 = vmatprep.subr.mxu0 0.0
    %165 = vmatpush1.msra.mxu0 %v107
    %166 = vmatprep.subr.mxu0 0.0
    %167 = vmatpush1.msra.mxu0 %v106
    %168 = vmatprep.subr.mxu0 0.0
    %169 = vmatpush2.msra.mxu0 0.0
    %170 = vmatprep.subr.mxu0 0.0
    %171 = vmatpush2.msra.mxu0 0.0
    %172 = vmatprep.subr.mxu0 0.0
    %173 = vmatpush2.msra.mxu0 0.0
    %174 = vmatprep.subr.mxu0 0.0
    %175 = vmatpush2.msra.mxu0 0.0
    %176 = vmatprep.subr.mxu0 0.0
    %177 = vmatpush2.msra.mxu0 0.0
    %178 = vmatprep.subr.mxu0 0.0
    %179 = vmatpush2.msra.mxu0 0.0
    %180 = vmatprep.subr.mxu0 0.0
    %181 = vmatpush2.msra.mxu0 0.0
    %182 = vmatprep.subr.mxu0 0.0
    %183 = vmatpush2.msra.mxu0 0.0
    %184 = vmatprep.subr.mxu0 0.0
    %185 = vmatpush2.msra.mxu0 0.0
    %186 = vmatprep.subr.mxu0 0.0
    %187 = vmatpush2.msra.mxu0 0.0
    %188 = vmatprep.subr.mxu0 0.0
    %189 = vmatpush2.msra.mxu0 0.0
    %190 = vmatprep.subr.mxu0 0.0
    %191 = vmatpush2.msra.mxu0 0.0
    %192 = vmatprep.subr.mxu0 0.0
    %193 = vmatpush2.msra.mxu0 0.0
    %194 = vmatprep.subr.mxu0 0.0
    %195 = vmatpush2.msra.mxu0 0.0
    %196 = vmatprep.subr.mxu0 0.0
    %197 = vmatpush2.msra.mxu0 0.0
    %198 = vmatprep.subr.mxu0 0.0
    %199 = vmatpush2.msra.mxu0 0.0
    %200 = vmatprep.mubr.f32.mxu0 0.0
    %201 = vmatmul.mubr.f32.gmra.mxu0 %v121
    %v202 = vpop.f32.mrf.mxu0
    %v203 = vadd.f32 %v117, %v202
    %v204 = vpop.f32.mrf.mxu0
    %205 = vmatprep.mubr.f32.mxu0 0.0
    %206 = vmatmul.mubr.f32.gmra.mxu0 %v124
    %v207 = vpop.f32.mrf.mxu0
    %v208 = vadd.f32 %v117, %v207
    %v209 = vpop.f32.mrf.mxu0
    %210 = vmatprep.mubr.f32.mxu0 0.0
    %211 = vmatmul.mubr.f32.gmra.mxu0 %v127
    %v212 = vpop.f32.mrf.mxu0
    %v213 = vadd.f32 %v117, %v212
    %v214 = vpop.f32.mrf.mxu0
    %215 = vmatprep.mubr.f32.mxu0 0.0
    %216 = vmatmul.mubr.f32.gmra.mxu0 %v130
    %v217 = vpop.f32.mrf.mxu0
    %v218 = vadd.f32 %v117, %v217
    %v219 = vpop.f32.mrf.mxu0
    %220 = vdwg.mxu0
    %vm221 = vcmp.gt.f32.partialorder %v203, 0.0
    %vm222 = vcmp.gt.f32.partialorder %v208, 0.0
    %vm223 = vcmp.gt.f32.partialorder %v213, 0.0
    %vm224 = vcmp.gt.f32.partialorder %v218, 0.0
    %v225 = vmin.f32 %v203, 0.0
    %v226 = vmin.f32 %v208, 0.0
    %v227 = vmin.f32 %v213, 0.0
    %v228 = vmin.f32 %v218, 0.0
    %v229 = vmul.f32 %v225, 1.442695
    %v230 = vpow.pop %v229
    %v231 = vmul.f32 %v226, 1.442695
    %v232 = vpow.pop %v231
    %v233 = vmul.f32 %v227, 1.442695
    %v234 = vpow.pop %v233
    %v235 = vmul.f32 %v228, 1.442695
    %v236 = vpow.pop %v235
    %v237 = vsub.f32 %v230, 1.0
    %v238 = vsub.f32 %v232, 1.0
    %v239 = vsub.f32 %v234, 1.0
    %v240 = vsub.f32 %v236, 1.0
    %v241 = vsel %vm221, %v203, %v237
    %v242 = vsel %vm222, %v208, %v238
    %v243 = vsel %vm223, %v213, %v239
    %v244 = vsel %vm224, %v218, %v240
    %v249 = vcombine.high %v241, %v241
    %v251 = vunpack.c.l.s4 1983009808
    %v252 = vunpack.c.0.s8 %v251
    %v253 = vlaneseq
    %v254 = vshrl.u32 %v253, 7
    %v255 = vsub.s32 %v252, %v254
    %v256 = vrot.slane %v241, %v255
    %v258 = vunpack.c.l.s4 1983009808
    %v259 = vunpack.c.0.s8 %v258
    %v260 = vlaneseq
    %v261 = vshrl.u32 %v260, 7
    %v262 = vsub.s32 %v259, %v261
    %v263 = vrot.slane %v249, %v262
    %v264 = vcombine.high %v256, %v256
    %v265 = vcombine.high %v263, %v263
    %v266 = vcombine.high %v242, %v242
    %v268 = vunpack.c.l.s4 1983009808
    %v269 = vunpack.c.0.s8 %v268
    %v270 = vlaneseq
    %v271 = vshrl.u32 %v270, 7
    %v272 = vsub.s32 %v269, %v271
    %v273 = vrot.slane %v242, %v272
    %v275 = vunpack.c.l.s4 1983009808
    %v276 = vunpack.c.0.s8 %v275
    %v277 = vlaneseq
    %v278 = vshrl.u32 %v277, 7
    %v279 = vsub.s32 %v276, %v278
    %v280 = vrot.slane %v266, %v279
    %v281 = vcombine.high %v273, %v273
    %v282 = vcombine.high %v280, %v280
    %v283 = vcombine.high %v243, %v243
    %v285 = vunpack.c.l.s4 1983009808
    %v286 = vunpack.c.0.s8 %v285
    %v287 = vlaneseq
    %v288 = vshrl.u32 %v287, 7
    %v289 = vsub.s32 %v286, %v288
    %v290 = vrot.slane %v243, %v289
    %v292 = vunpack.c.l.s4 1983009808
    %v293 = vunpack.c.0.s8 %v292
    %v294 = vlaneseq
    %v295 = vshrl.u32 %v294, 7
    %v296 = vsub.s32 %v293, %v295
    %v297 = vrot.slane %v283, %v296
    %v298 = vcombine.high %v290, %v290
    %v299 = vcombine.high %v297, %v297
    %v300 = vcombine.high %v244, %v244
    %v302 = vunpack.c.l.s4 1983009808
    %v303 = vunpack.c.0.s8 %v302
    %v304 = vlaneseq
    %v305 = vshrl.u32 %v304, 7
    %v306 = vsub.s32 %v303, %v305
    %v307 = vrot.slane %v244, %v306
    %v309 = vunpack.c.l.s4 1983009808
    %v310 = vunpack.c.0.s8 %v309
    %v311 = vlaneseq
    %v312 = vshrl.u32 %v311, 7
    %v313 = vsub.s32 %v310, %v312
    %v314 = vrot.slane %v300, %v313
    %v315 = vcombine.high %v307, %v307
    %v316 = vcombine.high %v314, %v314
    %vm333 = vcmask 123904
    %v334 = vsel %vm333, %v256, 0.0
    %v335 = vrot.slane %v334, 4
    %v336 = vadd.f32 %v334, %v335
    %v337 = vrot.slane %v336, 2
    %v338 = vadd.f32 %v336, %v337
    %v339 = vrot.slane %v338, 1
    %v340 = vadd.f32 %v338, %v339
    %v341 = vsel %vm333, %v264, 0.0
    %v342 = vrot.slane %v341, 4
    %v343 = vadd.f32 %v341, %v342
    %v344 = vrot.slane %v343, 2
    %v345 = vadd.f32 %v343, %v344
    %v346 = vrot.slane %v345, 1
    %v347 = vadd.f32 %v345, %v346
    %v348 = vsel %vm333, %v263, 0.0
    %v349 = vrot.slane %v348, 4
    %v350 = vadd.f32 %v348, %v349
    %v351 = vrot.slane %v350, 2
    %v352 = vadd.f32 %v350, %v351
    %v353 = vrot.slane %v352, 1
    %v354 = vadd.f32 %v352, %v353
    %v355 = vsel %vm333, %v265, 0.0
    %v356 = vrot.slane %v355, 4
    %v357 = vadd.f32 %v355, %v356
    %v358 = vrot.slane %v357, 2
    %v359 = vadd.f32 %v357, %v358
    %v360 = vrot.slane %v359, 1
    %v361 = vadd.f32 %v359, %v360
    %v362 = vsel %vm333, %v273, 0.0
    %v363 = vrot.slane %v362, 4
    %v364 = vadd.f32 %v362, %v363
    %v365 = vrot.slane %v364, 2
    %v366 = vadd.f32 %v364, %v365
    %v367 = vrot.slane %v366, 1
    %v368 = vadd.f32 %v366, %v367
    %v369 = vsel %vm333, %v281, 0.0
    %v370 = vrot.slane %v369, 4
    %v371 = vadd.f32 %v369, %v370
    %v372 = vrot.slane %v371, 2
    %v373 = vadd.f32 %v371, %v372
    %v374 = vrot.slane %v373, 1
    %v375 = vadd.f32 %v373, %v374
    %v376 = vsel %vm333, %v280, 0.0
    %v377 = vrot.slane %v376, 4
    %v378 = vadd.f32 %v376, %v377
    %v379 = vrot.slane %v378, 2
    %v380 = vadd.f32 %v378, %v379
    %v381 = vrot.slane %v380, 1
    %v382 = vadd.f32 %v380, %v381
    %v383 = vsel %vm333, %v282, 0.0
    %v384 = vrot.slane %v383, 4
    %v385 = vadd.f32 %v383, %v384
    %v386 = vrot.slane %v385, 2
    %v387 = vadd.f32 %v385, %v386
    %v388 = vrot.slane %v387, 1
    %v389 = vadd.f32 %v387, %v388
    %v390 = vsel %vm333, %v290, 0.0
    %v391 = vrot.slane %v390, 4
    %v392 = vadd.f32 %v390, %v391
    %v393 = vrot.slane %v392, 2
    %v394 = vadd.f32 %v392, %v393
    %v395 = vrot.slane %v394, 1
    %v396 = vadd.f32 %v394, %v395
    %v397 = vsel %vm333, %v298, 0.0
    %v398 = vrot.slane %v397, 4
    %v399 = vadd.f32 %v397, %v398
    %v400 = vrot.slane %v399, 2
    %v401 = vadd.f32 %v399, %v400
    %v402 = vrot.slane %v401, 1
    %v403 = vadd.f32 %v401, %v402
    %v404 = vsel %vm333, %v297, 0.0
    %v405 = vrot.slane %v404, 4
    %v406 = vadd.f32 %v404, %v405
    %v407 = vrot.slane %v406, 2
    %v408 = vadd.f32 %v406, %v407
    %v409 = vrot.slane %v408, 1
    %v410 = vadd.f32 %v408, %v409
    %v411 = vsel %vm333, %v299, 0.0
    %v412 = vrot.slane %v411, 4
    %v413 = vadd.f32 %v411, %v412
    %v414 = vrot.slane %v413, 2
    %v415 = vadd.f32 %v413, %v414
    %v416 = vrot.slane %v415, 1
    %v417 = vadd.f32 %v415, %v416
    %v418 = vsel %vm333, %v307, 0.0
    %v419 = vrot.slane %v418, 4
    %v420 = vadd.f32 %v418, %v419
    %v421 = vrot.slane %v420, 2
    %v422 = vadd.f32 %v420, %v421
    %v423 = vrot.slane %v422, 1
    %v424 = vadd.f32 %v422, %v423
    %v425 = vsel %vm333, %v315, 0.0
    %v426 = vrot.slane %v425, 4
    %v427 = vadd.f32 %v425, %v426
    %v428 = vrot.slane %v427, 2
    %v429 = vadd.f32 %v427, %v428
    %v430 = vrot.slane %v429, 1
    %v431 = vadd.f32 %v429, %v430
    %v432 = vsel %vm333, %v314, 0.0
    %v433 = vrot.slane %v432, 4
    %v434 = vadd.f32 %v432, %v433
    %v435 = vrot.slane %v434, 2
    %v436 = vadd.f32 %v434, %v435
    %v437 = vrot.slane %v436, 1
    %v438 = vadd.f32 %v436, %v437
    %v439 = vsel %vm333, %v316, 0.0
    %v440 = vrot.slane %v439, 4
    %v441 = vadd.f32 %v439, %v440
    %v442 = vrot.slane %v441, 2
    %v443 = vadd.f32 %v441, %v442
    %v444 = vrot.slane %v443, 1
    %v445 = vadd.f32 %v443, %v444
    %v446 = vrcp.pop 2.0
    %v447 = vmul.f32 %v340, %v446
    %v448 = vmul.f32 %v347, %v446
    %v449 = vmul.f32 %v354, %v446
    %v450 = vmul.f32 %v361, %v446
    %v451 = vmul.f32 %v368, %v446
    %v452 = vmul.f32 %v375, %v446
    %v453 = vmul.f32 %v382, %v446
    %v454 = vmul.f32 %v389, %v446
    %v455 = vmul.f32 %v396, %v446
    %v456 = vmul.f32 %v403, %v446
    %v457 = vmul.f32 %v410, %v446
    %v458 = vmul.f32 %v417, %v446
    %v459 = vmul.f32 %v424, %v446
    %v460 = vmul.f32 %v431, %v446
    %v461 = vmul.f32 %v438, %v446
    %v462 = vmul.f32 %v445, %v446
    %v463 = vld [vmem:[%s3] sm:$0x1]
    %v464 = vld [vmem:[%s3 + $0x1] sm:$0x1]
    %v466 = vlaneseq
    %v467 = vshrl.u32 %v466, 7
    %v468 = vsub.s32 0, %v467
    %v469 = vrot.slane %v463, %v468
    %vm485 = vcmask 1041409
    %v486 = vsel %vm485, %v448, %v447
    %vm487 = vcmask 1042434
    %v488 = vsel %vm487, %v449, %v486
    %vm489 = vcmask 1043459
    %v490 = vsel %vm489, %v450, %v488
    %vm491 = vcmask 1044484
    %v492 = vsel %vm491, %v451, %v490
    %vm493 = vcmask 1045509
    %v494 = vsel %vm493, %v452, %v492
    %vm495 = vcmask 1046534
    %v496 = vsel %vm495, %v453, %v494
    %v497 = vsel %vm485, %v456, %v455
    %v498 = vsel %vm487, %v457, %v497
    %v499 = vsel %vm489, %v458, %v498
    %v500 = vsel %vm491, %v459, %v499
    %v501 = vsel %vm493, %v460, %v500
    %v502 = vsel %vm495, %v461, %v501
    %v505 = vmul.f32 %v469, %v496
    %v506 = vmul.f32 %v469, %v502
    %v508 = vlaneseq
    %v509 = vshrl.u32 %v508, 7
    %v510 = vsub.s32 0, %v509
    %v511 = vrot.slane %v464, %v510
    %v515 = vsel %vm485, %v449, %v448
    %v516 = vsel %vm487, %v450, %v515
    %v517 = vsel %vm489, %v451, %v516
    %v518 = vsel %vm491, %v452, %v517
    %v519 = vsel %vm493, %v453, %v518
    %v520 = vsel %vm495, %v454, %v519
    %v521 = vsel %vm485, %v457, %v456
    %v522 = vsel %vm487, %v458, %v521
    %v523 = vsel %vm489, %v459, %v522
    %v524 = vsel %vm491, %v460, %v523
    %v525 = vsel %vm493, %v461, %v524
    %v526 = vsel %vm495, %v462, %v525
    %v529 = vmul.f32 %v511, %v520
    %v530 = vmul.f32 %v511, %v526
    %v531 = vadd.f32 %v505, %v529
    %v532 = vadd.f32 %v506, %v530
    %v535 = vcombine.high %v531, %v531
    %v537 = vunpack.c.l.s4 1966171168
    %v538 = vunpack.c.0.s8 %v537
    %v539 = vlaneseq
    %v540 = vshrl.u32 %v539, 7
    %v541 = vsub.s32 %v538, %v540
    %v542 = vrot.slane %v531, %v541
    %v544 = vunpack.c.l.s4 1966171168
    %v545 = vunpack.c.0.s8 %v544
    %v546 = vlaneseq
    %v547 = vshrl.u32 %v546, 7
    %v548 = vsub.s32 %v545, %v547
    %v549 = vrot.slane %v535, %v548
    %v550 = vcombine.high %v542, %v542
    %v551 = vcombine.high %v549, %v549
    %v553 = vunpack.c.l.s4 1966171168
    %v554 = vunpack.c.0.s8 %v553
    %v555 = vlaneseq
    %v556 = vshrl.u32 %v555, 7
    %v557 = vsub.s32 %v554, %v556
    %v558 = vrot.slane %v542, %v557
    %v560 = vunpack.c.l.s4 1966171168
    %v561 = vunpack.c.0.s8 %v560
    %v562 = vlaneseq
    %v563 = vshrl.u32 %v562, 7
    %v564 = vsub.s32 %v561, %v563
    %v565 = vrot.slane %v549, %v564
    %v567 = vunpack.c.l.s4 1966171168
    %v568 = vunpack.c.0.s8 %v567
    %v569 = vlaneseq
    %v570 = vshrl.u32 %v569, 7
    %v571 = vsub.s32 %v568, %v570
    %v572 = vrot.slane %v550, %v571
    %v574 = vunpack.c.l.s4 1966171168
    %v575 = vunpack.c.0.s8 %v574
    %v576 = vlaneseq
    %v577 = vshrl.u32 %v576, 7
    %v578 = vsub.s32 %v575, %v577
    %v579 = vrot.slane %v551, %v578
    %v580 = vcombine.high %v558, %v558
    %v581 = vcombine.high %v565, %v565
    %v582 = vcombine.high %v572, %v572
    %v583 = vcombine.high %v532, %v532
    %v585 = vunpack.c.l.s4 1966171168
    %v586 = vunpack.c.0.s8 %v585
    %v587 = vlaneseq
    %v588 = vshrl.u32 %v587, 7
    %v589 = vsub.s32 %v586, %v588
    %v590 = vrot.slane %v532, %v589
    %v592 = vunpack.c.l.s4 1966171168
    %v593 = vunpack.c.0.s8 %v592
    %v594 = vlaneseq
    %v595 = vshrl.u32 %v594, 7
    %v596 = vsub.s32 %v593, %v595
    %v597 = vrot.slane %v583, %v596
    %v598 = vcombine.high %v590, %v590
    %v599 = vcombine.high %v597, %v597
    %v601 = vunpack.c.l.s4 1966171168
    %v602 = vunpack.c.0.s8 %v601
    %v603 = vlaneseq
    %v604 = vshrl.u32 %v603, 7
    %v605 = vsub.s32 %v602, %v604
    %v606 = vrot.slane %v590, %v605
    %v608 = vunpack.c.l.s4 1966171168
    %v609 = vunpack.c.0.s8 %v608
    %v610 = vlaneseq
    %v611 = vshrl.u32 %v610, 7
    %v612 = vsub.s32 %v609, %v611
    %v613 = vrot.slane %v597, %v612
    %v615 = vunpack.c.l.s4 1966171168
    %v616 = vunpack.c.0.s8 %v615
    %v617 = vlaneseq
    %v618 = vshrl.u32 %v617, 7
    %v619 = vsub.s32 %v616, %v618
    %v620 = vrot.slane %v598, %v619
    %v622 = vunpack.c.l.s4 1966171168
    %v623 = vunpack.c.0.s8 %v622
    %v624 = vlaneseq
    %v625 = vshrl.u32 %v624, 7
    %v626 = vsub.s32 %v623, %v625
    %v627 = vrot.slane %v599, %v626
    %v628 = vcombine.high %v606, %v606
    %v629 = vcombine.high %v613, %v613
    %v630 = vcombine.high %v620, %v620
    %v631 = vld [vmem:[%s4] sm:$0xff]
    %v632 = vld [vmem:[%s4 + $0x8] sm:$0xff]
    %v633 = vld [vmem:[%s5] sm:$0x1]
    %v635 = vlaneseq
    %v636 = vshrl.u32 %v635, 7
    %v637 = vsub.s32 0, %v636
    %v638 = vrot.slane %v633, %v637
    %v640 = vcombine.low %v558, %v572
    %v641 = vcombine.low %v580, %v582
    %v642 = vcombine.low %v565, %v579
    %v643 = vcombine.low %v581, %v606
    %v645 = vunpack.c.l.s4 1966171168
    %v646 = vunpack.c.0.s8 %v645
    %v647 = vlaneseq
    %v648 = vshrl.u32 %v647, 7
    %v649 = vsub.s32 %v646, %v648
    %v650 = vrot.slane %v640, %v649
    %v652 = vunpack.c.l.s4 1966171168
    %v653 = vunpack.c.0.s8 %v652
    %v654 = vlaneseq
    %v655 = vshrl.u32 %v654, 7
    %v656 = vsub.s32 %v653, %v655
    %v657 = vrot.slane %v641, %v656
    %v659 = vunpack.c.l.s4 1966171168
    %v660 = vunpack.c.0.s8 %v659
    %v661 = vlaneseq
    %v662 = vshrl.u32 %v661, 7
    %v663 = vsub.s32 %v660, %v662
    %v664 = vrot.slane %v642, %v663
    %v666 = vunpack.c.l.s4 1966171168
    %v667 = vunpack.c.0.s8 %v666
    %v668 = vlaneseq
    %v669 = vshrl.u32 %v668, 7
    %v670 = vsub.s32 %v667, %v669
    %v671 = vrot.slane %v643, %v670
    %v672 = vcombine.low %v650, %v657
    %v673 = vcombine.low %v664, %v671
    %v675 = vunpack.c.l.s4 1966171168
    %v676 = vunpack.c.0.s8 %v675
    %v677 = vlaneseq
    %v678 = vshrl.u32 %v677, 7
    %v679 = vsub.s32 %v676, %v678
    %v680 = vrot.slane %v672, %v679
    %v682 = vunpack.c.l.s4 1966171168
    %v683 = vunpack.c.0.s8 %v682
    %v684 = vlaneseq
    %v685 = vshrl.u32 %v684, 7
    %v686 = vsub.s32 %v683, %v685
    %v687 = vrot.slane %v673, %v686
    %v688 = vcombine.low %v680, %v687
    %v689 = vcombine.low %v620, %v628
    %v690 = vcombine.low %v630, %v613
    %v691 = vcombine.low %v627, %v629
    %v693 = vunpack.c.l.s4 1966171168
    %v694 = vunpack.c.0.s8 %v693
    %v695 = vlaneseq
    %v696 = vshrl.u32 %v695, 7
    %v697 = vsub.s32 %v694, %v696
    %v698 = vrot.slane %v689, %v697
    %v700 = vunpack.c.l.s4 1966171168
    %v701 = vunpack.c.0.s8 %v700
    %v702 = vlaneseq
    %v703 = vshrl.u32 %v702, 7
    %v704 = vsub.s32 %v701, %v703
    %v705 = vrot.slane %v690, %v704
    %v707 = vunpack.c.l.s4 1966171168
    %v708 = vunpack.c.0.s8 %v707
    %v709 = vlaneseq
    %v710 = vshrl.u32 %v709, 7
    %v711 = vsub.s32 %v708, %v710
    %v712 = vrot.slane %v691, %v711
    %v713 = vcombine.low %v698, %v705
    %v715 = vunpack.c.l.s4 1966171168
    %v716 = vunpack.c.0.s8 %v715
    %v717 = vlaneseq
    %v718 = vshrl.u32 %v717, 7
    %v719 = vsub.s32 %v716, %v718
    %v720 = vrot.slane %v713, %v719
    %v722 = vunpack.c.l.s4 1966171168
    %v723 = vunpack.c.0.s8 %v722
    %v724 = vlaneseq
    %v725 = vshrl.u32 %v724, 7
    %v726 = vsub.s32 %v723, %v725
    %v727 = vrot.slane %v712, %v726
    %v728 = vcombine.low %v720, %v727
    %vm729 = vcmask 130048
    %v730 = vsel %vm729, %v688, 0
    %v732 = vsel %vm729, %v728, 0
    %734 = vmatprep.subr.mxu0 0.0
    %735 = vmatpush1.msra.mxu0 0.0
    %736 = vmatprep.subr.mxu0 0.0
    %737 = vmatpush1.msra.mxu0 0.0
    %738 = vmatprep.subr.mxu0 0.0
    %739 = vmatpush1.msra.mxu0 0.0
    %740 = vmatprep.subr.mxu0 0.0
    %741 = vmatpush1.msra.mxu0 0.0
    %742 = vmatprep.subr.mxu0 0.0
    %743 = vmatpush1.msra.mxu0 0.0
    %744 = vmatprep.subr.mxu0 0.0
    %745 = vmatpush1.msra.mxu0 0.0
    %746 = vmatprep.subr.mxu0 0.0
    %747 = vmatpush1.msra.mxu0 0.0
    %748 = vmatprep.subr.mxu0 0.0
    %749 = vmatpush1.msra.mxu0 0.0
    %750 = vmatprep.subr.mxu0 0.0
    %751 = vmatpush1.msra.mxu0 0.0
    %752 = vmatprep.subr.mxu0 0.0
    %753 = vmatpush1.msra.mxu0 0.0
    %754 = vmatprep.subr.mxu0 0.0
    %755 = vmatpush1.msra.mxu0 0.0
    %756 = vmatprep.subr.mxu0 0.0
    %757 = vmatpush1.msra.mxu0 0.0
    %758 = vmatprep.subr.mxu0 0.0
    %759 = vmatpush1.msra.mxu0 0.0
    %760 = vmatprep.subr.mxu0 0.0
    %761 = vmatpush1.msra.mxu0 0.0
    %762 = vmatprep.subr.mxu0 0.0
    %763 = vmatpush1.msra.mxu0 %v632
    %764 = vmatprep.subr.mxu0 0.0
    %765 = vmatpush1.msra.mxu0 %v631
    %766 = vmatprep.subr.mxu0 0.0
    %767 = vmatpush2.msra.mxu0 0.0
    %768 = vmatprep.subr.mxu0 0.0
    %769 = vmatpush2.msra.mxu0 0.0
    %770 = vmatprep.subr.mxu0 0.0
    %771 = vmatpush2.msra.mxu0 0.0
    %772 = vmatprep.subr.mxu0 0.0
    %773 = vmatpush2.msra.mxu0 0.0
    %774 = vmatprep.subr.mxu0 0.0
    %775 = vmatpush2.msra.mxu0 0.0
    %776 = vmatprep.subr.mxu0 0.0
    %777 = vmatpush2.msra.mxu0 0.0
    %778 = vmatprep.subr.mxu0 0.0
    %779 = vmatpush2.msra.mxu0 0.0
    %780 = vmatprep.subr.mxu0 0.0
    %781 = vmatpush2.msra.mxu0 0.0
    %782 = vmatprep.subr.mxu0 0.0
    %783 = vmatpush2.msra.mxu0 0.0
    %784 = vmatprep.subr.mxu0 0.0
    %785 = vmatpush2.msra.mxu0 0.0
    %786 = vmatprep.subr.mxu0 0.0
    %787 = vmatpush2.msra.mxu0 0.0
    %788 = vmatprep.subr.mxu0 0.0
    %789 = vmatpush2.msra.mxu0 0.0
    %790 = vmatprep.subr.mxu0 0.0
    %791 = vmatpush2.msra.mxu0 0.0
    %792 = vmatprep.subr.mxu0 0.0
    %793 = vmatpush2.msra.mxu0 0.0
    %794 = vmatprep.subr.mxu0 0.0
    %795 = vmatpush2.msra.mxu0 0.0
    %796 = vmatprep.subr.mxu0 0.0
    %797 = vmatpush2.msra.mxu0 0.0
    %798 = vmatprep.mubr.f32.mxu0 0.0
    %799 = vmatmul.mubr.f32.gmra.mxu0 %v730
    %v800 = vpop.f32.mrf.mxu0
    %v801 = vadd.f32 %v638, %v800
    %v802 = vpop.f32.mrf.mxu0
    %803 = vmatprep.mubr.f32.mxu0 0.0
    %804 = vmatmul.mubr.f32.gmra.mxu0 %v732
    %v805 = vpop.f32.mrf.mxu0
    %v806 = vadd.f32 %v638, %v805
    %v807 = vpop.f32.mrf.mxu0
    %808 = vdwg.mxu0
    %vm809 = vcmp.gt.f32.partialorder %v801, 0.0
    %vm810 = vcmp.gt.f32.partialorder %v806, 0.0
    %v811 = vmin.f32 %v801, 0.0
    %v812 = vmin.f32 %v806, 0.0
    %v813 = vmul.f32 %v811, 1.442695
    %v814 = vpow.pop %v813
    %v815 = vmul.f32 %v812, 1.442695
    %v816 = vpow.pop %v815
    %v817 = vsub.f32 %v814, 1.0
    %v818 = vsub.f32 %v816, 1.0
    %v819 = vsel %vm809, %v801, %v817
    %v820 = vsel %vm810, %v806, %v818
    %v823 = vcombine.high %v819, %v819
    %v825 = vunpack.c.l.s4 1966171168
    %v826 = vunpack.c.0.s8 %v825
    %v827 = vlaneseq
    %v828 = vshrl.u32 %v827, 7
    %v829 = vsub.s32 %v826, %v828
    %v830 = vrot.slane %v819, %v829
    %v832 = vunpack.c.l.s4 1966171168
    %v833 = vunpack.c.0.s8 %v832
    %v834 = vlaneseq
    %v835 = vshrl.u32 %v834, 7
    %v836 = vsub.s32 %v833, %v835
    %v837 = vrot.slane %v823, %v836
    %v838 = vcombine.high %v830, %v830
    %v839 = vcombine.high %v837, %v837
    %v841 = vunpack.c.l.s4 1966171168
    %v842 = vunpack.c.0.s8 %v841
    %v843 = vlaneseq
    %v844 = vshrl.u32 %v843, 7
    %v845 = vsub.s32 %v842, %v844
    %v846 = vrot.slane %v830, %v845
    %v848 = vunpack.c.l.s4 1966171168
    %v849 = vunpack.c.0.s8 %v848
    %v850 = vlaneseq
    %v851 = vshrl.u32 %v850, 7
    %v852 = vsub.s32 %v849, %v851
    %v853 = vrot.slane %v838, %v852
    %v855 = vunpack.c.l.s4 1966171168
    %v856 = vunpack.c.0.s8 %v855
    %v857 = vlaneseq
    %v858 = vshrl.u32 %v857, 7
    %v859 = vsub.s32 %v856, %v858
    %v860 = vrot.slane %v839, %v859
    %v861 = vcombine.high %v846, %v846
    %v862 = vcombine.high %v853, %v853
    %v863 = vcombine.high %v860, %v860
    %v865 = vunpack.c.l.s4 1966171168
    %v866 = vunpack.c.0.s8 %v865
    %v867 = vlaneseq
    %v868 = vshrl.u32 %v867, 7
    %v869 = vsub.s32 %v866, %v868
    %v870 = vrot.slane %v820, %v869
    %v871 = vcombine.high %v870, %v870
    %v873 = vunpack.c.l.s4 1966171168
    %v874 = vunpack.c.0.s8 %v873
    %v875 = vlaneseq
    %v876 = vshrl.u32 %v875, 7
    %v877 = vsub.s32 %v874, %v876
    %v878 = vrot.slane %v870, %v877
    %v880 = vunpack.c.l.s4 1966171168
    %v881 = vunpack.c.0.s8 %v880
    %v882 = vlaneseq
    %v883 = vshrl.u32 %v882, 7
    %v884 = vsub.s32 %v881, %v883
    %v885 = vrot.slane %v871, %v884
    %v886 = vcombine.high %v878, %v878
    %v887 = vcombine.low %v846, %v853
    %v888 = vcombine.low %v861, %v862
    %v890 = vunpack.c.l.s4 1966171168
    %v891 = vunpack.c.0.s8 %v890
    %v892 = vlaneseq
    %v893 = vshrl.u32 %v892, 7
    %v894 = vsub.s32 %v891, %v893
    %v895 = vrot.slane %v887, %v894
    %v897 = vunpack.c.l.s4 1966171168
    %v898 = vunpack.c.0.s8 %v897
    %v899 = vlaneseq
    %v900 = vshrl.u32 %v899, 7
    %v901 = vsub.s32 %v898, %v900
    %v902 = vrot.slane %v888, %v901
    %v903 = vcombine.low %v895, %v902
    %v905 = vunpack.c.l.s4 1966171168
    %v906 = vunpack.c.0.s8 %v905
    %v907 = vlaneseq
    %v908 = vshrl.u32 %v907, 7
    %v909 = vsub.s32 %v906, %v908
    %v910 = vrot.slane %v903, %v909
    %v911 = vcombine.low %v863, %v878
    %v912 = vcombine.low %v885, %v886
    %v914 = vunpack.c.l.s4 1966171168
    %v915 = vunpack.c.0.s8 %v914
    %v916 = vlaneseq
    %v917 = vshrl.u32 %v916, 7
    %v918 = vsub.s32 %v915, %v917
    %v919 = vrot.slane %v911, %v918
    %v921 = vunpack.c.l.s4 1966171168
    %v922 = vunpack.c.0.s8 %v921
    %v923 = vlaneseq
    %v924 = vshrl.u32 %v923, 7
    %v925 = vsub.s32 %v922, %v924
    %v926 = vrot.slane %v912, %v925
    %v927 = vcombine.low %v919, %v926
    %v929 = vunpack.c.l.s4 1966171168
    %v930 = vunpack.c.0.s8 %v929
    %v931 = vlaneseq
    %v932 = vshrl.u32 %v931, 7
    %v933 = vsub.s32 %v930, %v932
    %v934 = vrot.slane %v927, %v933
    %vm937 = vcmask 125952
    %v938 = vsel %vm937, %v910, 0.0
    %v939 = vrot.slane %v938, 4
    %v940 = vadd.f32 %v938, %v939
    %v941 = vrot.slane %v940, 2
    %v942 = vadd.f32 %v940, %v941
    %v943 = vrot.slane %v942, 1
    %v944 = vadd.f32 %v942, %v943
    %v945 = vsel %vm937, %v934, 0.0
    %v946 = vrot.slane %v945, 4
    %v947 = vadd.f32 %v945, %v946
    %v948 = vrot.slane %v947, 2
    %v949 = vadd.f32 %v947, %v948
    %v950 = vrot.slane %v949, 1
    %v951 = vadd.f32 %v949, %v950
    %v952 = vrcp.pop 4.0
    %v953 = vmul.f32 %v944, %v952
    %v954 = vmul.f32 %v951, %v952
    %v955 = vld [vmem:[%s6] sm:$0xff]
    %v956 = vld [vmem:[%s6 + $0x8] sm:$0xff]
    %v957 = vld [vmem:[%s7] sm:$0x1]
    %v959 = vlaneseq
    %v960 = vshrl.u32 %v959, 7
    %v961 = vsub.s32 0, %v960
    %v962 = vrot.slane %v957, %v961
    %v966 = vsel %vm485, %v954, %v953
    %v967 = vsel %vm729, %v966, 0
    %969 = vmatprep.subr.mxu0 0.0
    %970 = vmatpush1.msra.mxu0 0.0
    %971 = vmatprep.subr.mxu0 0.0
    %972 = vmatpush1.msra.mxu0 0.0
    %973 = vmatprep.subr.mxu0 0.0
    %974 = vmatpush1.msra.mxu0 0.0
    %975 = vmatprep.subr.mxu0 0.0
    %976 = vmatpush1.msra.mxu0 0.0
    %977 = vmatprep.subr.mxu0 0.0
    %978 = vmatpush1.msra.mxu0 0.0
    %979 = vmatprep.subr.mxu0 0.0
    %980 = vmatpush1.msra.mxu0 0.0
    %981 = vmatprep.subr.mxu0 0.0
    %982 = vmatpush1.msra.mxu0 0.0
    %983 = vmatprep.subr.mxu0 0.0
    %984 = vmatpush1.msra.mxu0 0.0
    %985 = vmatprep.subr.mxu0 0.0
    %986 = vmatpush1.msra.mxu0 0.0
    %987 = vmatprep.subr.mxu0 0.0
    %988 = vmatpush1.msra.mxu0 0.0
    %989 = vmatprep.subr.mxu0 0.0
    %990 = vmatpush1.msra.mxu0 0.0
    %991 = vmatprep.subr.mxu0 0.0
    %992 = vmatpush1.msra.mxu0 0.0
    %993 = vmatprep.subr.mxu0 0.0
    %994 = vmatpush1.msra.mxu0 0.0
    %995 = vmatprep.subr.mxu0 0.0
    %996 = vmatpush1.msra.mxu0 0.0
    %997 = vmatprep.subr.mxu0 0.0
    %998 = vmatpush1.msra.mxu0 %v956
    %999 = vmatprep.subr.mxu0 0.0
    %1000 = vmatpush1.msra.mxu0 %v955
    %1001 = vmatprep.subr.mxu0 0.0
    %1002 = vmatpush2.msra.mxu0 0.0
    %1003 = vmatprep.subr.mxu0 0.0
    %1004 = vmatpush2.msra.mxu0 0.0
    %1005 = vmatprep.subr.mxu0 0.0
    %1006 = vmatpush2.msra.mxu0 0.0
    %1007 = vmatprep.subr.mxu0 0.0
    %1008 = vmatpush2.msra.mxu0 0.0
    %1009 = vmatprep.subr.mxu0 0.0
    %1010 = vmatpush2.msra.mxu0 0.0
    %1011 = vmatprep.subr.mxu0 0.0
    %1012 = vmatpush2.msra.mxu0 0.0
    %1013 = vmatprep.subr.mxu0 0.0
    %1014 = vmatpush2.msra.mxu0 0.0
    %1015 = vmatprep.subr.mxu0 0.0
    %1016 = vmatpush2.msra.mxu0 0.0
    %1017 = vmatprep.subr.mxu0 0.0
    %1018 = vmatpush2.msra.mxu0 0.0
    %1019 = vmatprep.subr.mxu0 0.0
    %1020 = vmatpush2.msra.mxu0 0.0
    %1021 = vmatprep.subr.mxu0 0.0
    %1022 = vmatpush2.msra.mxu0 0.0
    %1023 = vmatprep.subr.mxu0 0.0
    %1024 = vmatpush2.msra.mxu0 0.0
    %1025 = vmatprep.subr.mxu0 0.0
    %1026 = vmatpush2.msra.mxu0 0.0
    %1027 = vmatprep.subr.mxu0 0.0
    %1028 = vmatpush2.msra.mxu0 0.0
    %1029 = vmatprep.subr.mxu0 0.0
    %1030 = vmatpush2.msra.mxu0 0.0
    %1031 = vmatprep.subr.mxu0 0.0
    %1032 = vmatpush2.msra.mxu0 0.0
    %1033 = vmatprep.mubr.f32.mxu0 0.0
    %1034 = vmatmul.mubr.f32.gmra.mxu0 %v967
    %v1035 = vpop.f32.mrf.mxu0
    %v1036 = vadd.f32 %v962, %v1035
    %v1037 = vpop.f32.mrf.mxu0
    %1038 = vdwg.mxu0
    %vm1039 = vcmask 25600
    %v1040 = vsel %vm1039, %v1036, -inf
    %1041 = vmax.xlane.f32.xlu0 %v1040
    %v1042 = vpop.xlane.xlu0 %1041
    %v1043 = vsub.f32 %v1036, %v1042
    %v1044 = vmul.f32 %v1043, 1.442695
    %v1045 = vpow.pop %v1044
    %v1046 = vsel %vm1039, %v1045, 0.0
    %1047 = vadd.xlane.f32.xlu0 %v1046
    %v1048 = vpop.xlane.xlu0 %1047
    %v1049 = vrcp.pop %v1048
    %v1050 = vmul.f32 %v1045, %v1049
    %1051 = vst.msk [vmem:[#allocation4] sm:$0x3] %vm1039, %v1050
    // Predicated region
    $region34: #{tpu_custom_call.1} parent=1 // pred_check
      _
    $region35: #{tpu_custom_call.1} parent=1 // pred_check_branch
      %1053 = sbr.rel (0) target = $region37
    $region36: #{tpu_custom_call.1} parent=1 // pred_region
      %s1055 = ssub.s32 32, 32
      %1056 = vsyncadd [#allocation5], %s1055
      %s1058 = sshll.u32 [#allocation4], 4
      %s1059 = int_to_ptr.vmem [resolvable:$true] %s1058
      %1061 = dma.vmem_to_hbm [thread:$0]  %s1059, 32, %s8, [#allocation5]
    $region37: #{tpu_custom_call.1} parent=1 // pred_fallthru
      _
    // Predicated region
    $region38: #{tpu_custom_call.1} parent=1 // pred_check
      _
    $region39: #{tpu_custom_call.1} parent=1 // pred_check_branch
      %1063 = sbr.rel (0) target = $region41
    $region40: #{tpu_custom_call.1} parent=1 // pred_region
      %1064 = dma.done [#allocation5], 32
    $region41: #{tpu_custom_call.1} parent=1 // pred_fallthru
      _
    %1065 = vsyncpa [#allocation5], 1

</llo_original>
